<compile_context>
chip_gen: v7x
topology: tpu7x:2x2x1
jax: 0.10.0
libtpu: 0.0.40
codegen_flags: <defaults>
</compile_context>

<pallas_src>
import functools

import jax
import jax.numpy as jnp
from jax.experimental import pallas as pl
from jax.experimental.pallas import tpu as pltpu


# ----------------------------- Pallas kernel ------------------------------
# Column-oriented math: the projection is computed as
#   feat_T = w1^T (HIDDEN, C) @ x_tile (C, TS)  -> (HIDDEN, TS)
# so the activations never need a layout transpose (S stays the lane axis),
# the spatial pool is a running lane-sum into a (HIDDEN, 1) accumulator, and
# the classifier is a tiny (NCLS, HIDDEN) @ (HIDDEN, 1) matmul in the final
# grid step only.
def _cal_inner_kernel(inv_s, x_ref, w1t_ref, b1_ref, w2t_ref, b2_ref,
                      logits_ref, acc_ref):
    s_idx = pl.program_id(1)

    @pl.when(s_idx == 0)
    def _():
        acc_ref[...] = jnp.zeros_like(acc_ref)

    # 1x1-conv projection on the MXU: (HIDDEN, C) @ (C, TS) -> (HIDDEN, TS).
    # No input upcast; accumulate in f32 via preferred_element_type.
    feat = jnp.dot(w1t_ref[...], x_ref[...],
                   preferred_element_type=jnp.float32)
    feat = jnp.maximum(feat + b1_ref[...], 0.0)          # bias + ReLU (VPU)

    # Partial global-average-pool: accumulate the spatial sum for this tile.
    acc_ref[...] += jnp.sum(feat, axis=1, keepdims=True)  # (HIDDEN, 1)

    @pl.when(s_idx == pl.num_programs(1) - 1)
    def _():
        pooled = acc_ref[...] * inv_s                     # fold 1/S, epilogue only
        logits = jnp.dot(w2t_ref[...], pooled,            # (NCLS, 1)
                         preferred_element_type=jnp.float32) + b2_ref[...]
        logits_ref[...] = logits.astype(logits_ref.dtype)


def cal_model_forward(x_nchw, params, *, spatial_tile=128):
    """Synthetic CAL inner model.  Returns a tuple whose element 0 is logits."""
    w1, b1, w2, b2 = params            # (C,H), (H,), (H,NCLS), (NCLS,)
    N, C, H, W = x_nchw.shape
    S = H * W
    hidden = w1.shape[1]
    ncls = w2.shape[1]

    # Spatial tile: 128 is plenty for the demo and exercises the accumulation
    # path.  For real CAL/CLIP shapes pick the largest 128-multiple that fits
    # the per-generation VMEM budget (≈512 on v7x's 64 MiB, 1024–2048 on
    # v5e/v6e) and raise vmem_limit_bytes accordingly.
    ts = spatial_tile if S % spatial_tile == 0 else S

    # Layout prep touches only the tiny weights; the activations are just
    # reshaped (NCHW -> (N, C, S) is contiguous: no HBM transpose round-trip).
    x_ncs = x_nchw.reshape(N, C, S)
    w1t = w1.T                          # (hidden, C)
    b1c = b1.reshape(hidden, 1)         # lane-broadcast bias
    w2t = w2.T                          # (ncls, hidden)
    b2c = b2.reshape(ncls, 1)

    itemsize = jnp.dtype(x_nchw.dtype).itemsize
    cost = pl.CostEstimate(
        flops=int(2 * N * S * C * hidden + 2 * N * hidden * ncls),
        transcendentals=0,
        bytes_accessed=int(N * C * S * itemsize
                           + (w1.size + b1.size + w2.size + b2.size) * itemsize
                           + N * ncls * 4),
    )

    logits_col = pl.pallas_call(
        functools.partial(_cal_inner_kernel, 1.0 / S),
        out_shape=jax.ShapeDtypeStruct((N, ncls, 1), jnp.float32),
        grid_spec=pltpu.PrefetchScalarGridSpec(
            num_scalar_prefetch=0,
            grid=(N, S // ts),                      # reduction (S) axis last
            in_specs=[
                # Activations: one (C, ts) spatial tile per (n, s) grid point.
                pl.BlockSpec((None, C, ts), lambda n, s: (n, 0, s)),
                # Tiny weights/biases: whole-array blocks, constant index_map.
                pl.BlockSpec((hidden, C), lambda n, s: (0, 0)),
                pl.BlockSpec((hidden, 1), lambda n, s: (0, 0)),
                pl.BlockSpec((ncls, hidden), lambda n, s: (0, 0)),
                pl.BlockSpec((ncls, 1), lambda n, s: (0, 0)),
            ],
            # Output block is resident across the S (reduction) axis; written
            # only in the final S step.
            out_specs=pl.BlockSpec((None, ncls, 1), lambda n, s: (n, 0, 0)),
            scratch_shapes=[pltpu.VMEM((hidden, 1), jnp.float32)],
        ),
        compiler_params=pltpu.CompilerParams(
            dimension_semantics=("parallel", "arbitrary")),
        cost_estimate=cost,
    )(x_ncs, w1t, b1c, w2t, b2c)

    logits = logits_col[..., 0]         # (N, ncls)
    # CAL-style output tuple; CALWrapper consumes only element 0, so the
    # (unused) pooled-features output is not materialized at all.
    return (logits,)


# ------------------------------ CALWrapper --------------------------------
class CALWrapperJAX:
    """JAX port of CALWrapper: wraps an inner model and returns out[0]."""

    def __init__(self, model_fn, params):
        self._model_fn = model_fn
        self._params = params
        self._return_layers = None  # stands in for clip_model._return_layers

    @property
    def return_layers(self):
        print('getter of x called')
        return self._return_layers

    @return_layers.setter
    def return_layers(self, value):
        print('setter of x called')
        self._return_layers = value

    @return_layers.deleter
    def return_layers(self):
        print('deleter of x called')
        del self._return_layers

    def __call__(self, *args):
        out = self._model_fn(*args, self._params)
        return out[0]  # forward returns first element of the model's output

    def state_dict(self):
        return {"w1": self._params[0], "b1": self._params[1],
                "w2": self._params[2], "b2": self._params[3]}


# --------------------------------- main ------------------------------------
if __name__ == "__main__":
    key = jax.random.PRNGKey(0)
    k_x, k_w1, k_b1, k_w2, k_b2 = jax.random.split(key, 5)

    N, C, H, W = 2, 4, 16, 16     # small NCHW image batch
    HIDDEN, NCLS = 32, 8

    x = jax.random.normal(k_x, (N, C, H, W), dtype=jnp.float32)

    # Deterministic synthetic parameters (lane-friendly flat bias shapes).
    w1 = jax.random.normal(k_w1, (C, HIDDEN), dtype=jnp.float32) * 0.1
    b1 = jax.random.normal(k_b1, (HIDDEN,), dtype=jnp.float32) * 0.01
    w2 = jax.random.normal(k_w2, (HIDDEN, NCLS), dtype=jnp.float32) * 0.1
    b2 = jax.random.normal(k_b2, (NCLS,), dtype=jnp.float32) * 0.01
    params = (w1, b1, w2, b2)

    wrapper = CALWrapperJAX(cal_model_forward, params)
    logits = wrapper(x)                 # == model(x)[0]
    jax.block_until_ready(logits)

    # Cross-check against a pure-JAX reference of the same forward.
    x_nsc = jnp.transpose(x, (0, 2, 3, 1)).reshape(N, H * W, C)
    feat_ref = jnp.maximum(jnp.einsum('nsc,ch->nsh', x_nsc, w1) + b1, 0.0)
    logits_ref = jnp.mean(feat_ref, axis=1) @ w2 + b2

    assert logits.shape == (N, NCLS)
    assert jnp.allclose(logits, logits_ref, atol=1e-4, rtol=1e-4)

    print("KERNEL_OK")
</pallas_src>

<mosaic_0001>
module attributes {stable_mosaic.version = 11 : i64} {
  func.func @_cal_inner_kernel(%arg0: i32, %arg1: i32, %arg2: memref<1x4x128xf32, #tpu.memory_space<vmem>>, %arg3: memref<32x4xf32, #tpu.memory_space<vmem>>, %arg4: memref<32x1xf32, #tpu.memory_space<vmem>>, %arg5: memref<8x32xf32, #tpu.memory_space<vmem>>, %arg6: memref<8x1xf32, #tpu.memory_space<vmem>>, %arg7: memref<1x8x1xf32, #tpu.memory_space<vmem>>, %arg8: memref<32x1xf32, #tpu.memory_space<vmem>>) attributes {dimension_semantics = [#tpu.dimension_semantics<parallel>, #tpu.dimension_semantics<arbitrary>], iteration_bounds = array<i64: 2, 2>, scalar_prefetch = 0 : i64, scratch_operands = 1 : i64, tpu.core_type = #tpu.core_type<tc>, window_params = [{transform_indices = @transform_0, window_bounds = array<i64: 1, 4, 128>}, {pipeline_mode = #tpu.pipeline_mode<synchronous>, transform_indices = @transform_1, window_bounds = array<i64: 32, 4>}, {pipeline_mode = #tpu.pipeline_mode<synchronous>, transform_indices = @transform_2, window_bounds = array<i64: 32, 1>}, {pipeline_mode = #tpu.pipeline_mode<synchronous>, transform_indices = @transform_3, window_bounds = array<i64: 8, 32>}, {pipeline_mode = #tpu.pipeline_mode<synchronous>, transform_indices = @transform_4, window_bounds = array<i64: 8, 1>}, {transform_indices = @transform_5, window_bounds = array<i64: 1, 8, 1>}]} {
    %c0_i32 = arith.constant 0 : i32
    %0 = arith.cmpi eq, %arg1, %c0_i32 : i32
    %1 = arith.extui %0 : i1 to i32
    %c0_i32_0 = arith.constant 0 : i32
    %2 = arith.cmpi ne, %1, %c0_i32_0 : i32
    scf.if %2 {
      %cst_14 = arith.constant 0.000000e+00 : f32
      %20 = vector.broadcast %cst_14 : f32 to vector<32x1xf32>
      %c0_15 = arith.constant 0 : index
      %c0_16 = arith.constant 0 : index
      %21 = vector.load %arg8[%c0_15, %c0_16] : memref<32x1xf32, #tpu.memory_space<vmem>>, vector<32x1xf32>
      tpu.vector_store %arg8[%c0_15, %c0_16], %20 {strides = array<i32>} : memref<32x1xf32, #tpu.memory_space<vmem>>, vector<32x1xf32>,
    } else {
    }
    %c0 = arith.constant 0 : index
    %c0_1 = arith.constant 0 : index
    %3 = vector.load %arg3[%c0, %c0_1] : memref<32x4xf32, #tpu.memory_space<vmem>>, vector<32x4xf32>
    %c0_2 = arith.constant 0 : index
    %c0_3 = arith.constant 0 : index
    %c0_4 = arith.constant 0 : index
    %4 = vector.load %arg2[%c0_2, %c0_3, %c0_4] : memref<1x4x128xf32, #tpu.memory_space<vmem>>, vector<1x4x128xf32>
    %5 = vector.shape_cast %4 : vector<1x4x128xf32> to vector<4x128xf32>
    %cst = arith.constant dense<0.000000e+00> : vector<32x128xf32>
    %6 = tpu.matmul %3, %5, %cst {dimension_numbers = #tpu.dot_dimension_numbers<[1], [0], [0], [1], [0, 0, 1, 1], [], []>} : vector<32x4xf32>, vector<4x128xf32>, vector<32x128xf32> -> vector<32x128xf32>
    %c0_5 = arith.constant 0 : index
    %c0_6 = arith.constant 0 : index
    %7 = vector.load %arg4[%c0_5, %c0_6] : memref<32x1xf32, #tpu.memory_space<vmem>>, vector<32x1xf32>
    %8 = vector.broadcast %7 : vector<32x1xf32> to vector<32x128xf32>
    %9 = arith.addf %6, %8 : vector<32x128xf32>
    %cst_7 = arith.constant 0.000000e+00 : f32
    %10 = vector.broadcast %cst_7 : f32 to vector<32x128xf32>
    %11 = arith.maximumf %9, %10 : vector<32x128xf32>
    %c0_8 = arith.constant 0 : index
    %c0_9 = arith.constant 0 : index
    %12 = vector.load %arg8[%c0_8, %c0_9] : memref<32x1xf32, #tpu.memory_space<vmem>>, vector<32x1xf32>
    %cst_10 = arith.constant dense<0.000000e+00> : vector<32xf32>
    %13 = vector.multi_reduction <add>, %11, %cst_10 [1] : vector<32x128xf32> to vector<32xf32>
    %14 = vector.shape_cast %13 : vector<32xf32> to vector<32x1xf32>
    %15 = arith.addf %12, %14 : vector<32x1xf32>
    %c0_11 = arith.constant 0 : index
    %c0_12 = arith.constant 0 : index
    %16 = vector.load %arg8[%c0_11, %c0_12] : memref<32x1xf32, #tpu.memory_space<vmem>>, vector<32x1xf32>
    tpu.vector_store %arg8[%c0_11, %c0_12], %15 {strides = array<i32>} : memref<32x1xf32, #tpu.memory_space<vmem>>, vector<32x1xf32>,
    %c1_i32 = arith.constant 1 : i32
    %17 = arith.cmpi eq, %arg1, %c1_i32 : i32
    %18 = arith.extui %17 : i1 to i32
    %c0_i32_13 = arith.constant 0 : i32
    %19 = arith.cmpi ne, %18, %c0_i32_13 : i32
    scf.if %19 {
      %c0_14 = arith.constant 0 : index
      %c0_15 = arith.constant 0 : index
      %20 = vector.load %arg8[%c0_14, %c0_15] : memref<32x1xf32, #tpu.memory_space<vmem>>, vector<32x1xf32>
      %cst_16 = arith.constant 3.906250e-03 : f32
      %21 = vector.broadcast %cst_16 : f32 to vector<32x1xf32>
      %22 = arith.mulf %20, %21 : vector<32x1xf32>
      %c0_17 = arith.constant 0 : index
      %c0_18 = arith.constant 0 : index
      %23 = vector.load %arg5[%c0_17, %c0_18] : memref<8x32xf32, #tpu.memory_space<vmem>>, vector<8x32xf32>
      %cst_19 = arith.constant dense<0.000000e+00> : vector<8x1xf32>
      %24 = tpu.matmul %23, %22, %cst_19 {dimension_numbers = #tpu.dot_dimension_numbers<[1], [0], [0], [1], [0, 0, 1, 1], [], []>} : vector<8x32xf32>, vector<32x1xf32>, vector<8x1xf32> -> vector<8x1xf32>
      %c0_20 = arith.constant 0 : index
      %c0_21 = arith.constant 0 : index
      %25 = vector.load %arg6[%c0_20, %c0_21] : memref<8x1xf32, #tpu.memory_space<vmem>>, vector<8x1xf32>
      %26 = arith.addf %24, %25 : vector<8x1xf32>
      %c0_22 = arith.constant 0 : index
      %c0_23 = arith.constant 0 : index
      %c0_24 = arith.constant 0 : index
      %27 = vector.load %arg7[%c0_22, %c0_23, %c0_24] : memref<1x8x1xf32, #tpu.memory_space<vmem>>, vector<1x8x1xf32>
      %28 = vector.shape_cast %27 : vector<1x8x1xf32> to vector<8x1xf32>
      %29 = vector.shape_cast %26 : vector<8x1xf32> to vector<1x8x1xf32>
      tpu.vector_store %arg7[%c0_22, %c0_23, %c0_24], %29 {strides = array<i32>} : memref<1x8x1xf32, #tpu.memory_space<vmem>>, vector<1x8x1xf32>,
    } else {
    }
    return
  }
  func.func @transform_0(%arg0: i32, %arg1: i32) -> (i32, i32, i32) {
    %c0_i32 = arith.constant 0 : i32
    %c0_i32_0 = arith.constant 0 : i32
    return %arg0, %c0_i32, %arg1 : i32, i32, i32
  }
  func.func @transform_1(%arg0: i32, %arg1: i32) -> (i32, i32) {
    %c0_i32 = arith.constant 0 : i32
    %c0_i32_0 = arith.constant 0 : i32
    %c0_i32_1 = arith.constant 0 : i32
    return %c0_i32, %c0_i32_0 : i32, i32
  }
  func.func @transform_2(%arg0: i32, %arg1: i32) -> (i32, i32) {
    %c0_i32 = arith.constant 0 : i32
    %c0_i32_0 = arith.constant 0 : i32
    %c0_i32_1 = arith.constant 0 : i32
    return %c0_i32, %c0_i32_0 : i32, i32
  }
  func.func @transform_3(%arg0: i32, %arg1: i32) -> (i32, i32) {
    %c0_i32 = arith.constant 0 : i32
    %c0_i32_0 = arith.constant 0 : i32
    %c0_i32_1 = arith.constant 0 : i32
    return %c0_i32, %c0_i32_0 : i32, i32
  }
  func.func @transform_4(%arg0: i32, %arg1: i32) -> (i32, i32) {
    %c0_i32 = arith.constant 0 : i32
    %c0_i32_0 = arith.constant 0 : i32
    %c0_i32_1 = arith.constant 0 : i32
    return %c0_i32, %c0_i32_0 : i32, i32
  }
  func.func @transform_5(%arg0: i32, %arg1: i32) -> (i32, i32, i32) {
    %c0_i32 = arith.constant 0 : i32
    %c0_i32_0 = arith.constant 0 : i32
    %c0_i32_1 = arith.constant 0 : i32
    return %arg0, %c0_i32, %c0_i32_0 : i32, i32, i32
  }
}

</mosaic_0001>

<llo_original>
// kernel: tpu_custom_call.1
$region0: #{tpu_custom_call.1}
  #allocation0 [shape = 'u32[]', space=smem, size = 0x4, offset = 0x4, fixed_abs, tag = 'smem constant byte address 0x4 - core index']
  #allocation1 [shape = 'u32[144,128]{1,0:T(1,128)}', space=vmem, size = 0x12000, scoped, tag = 'internal scratch']
  #allocation2 [shape = 'f32[32,1]{1,0:T(8,128)}', space=vmem, size = 0x4000, scoped, tag = 'scratch operand']
  %s0 = inlined_call_operand.vmem [shape: f32[2,4,256], index: 0, kind: input, shape index: {}]
  %s1 = inlined_call_operand.vmem [shape: f32[32,4], index: 1, kind: input, shape index: {}]
  %s2 = inlined_call_operand.vmem [shape: f32[32,1], index: 2, kind: input, shape index: {}]
  %s3 = inlined_call_operand.vmem [shape: f32[8,32], index: 3, kind: input, shape index: {}]
  %s4 = inlined_call_operand.vmem [shape: f32[8,1], index: 4, kind: input, shape index: {}]
  %s5 = inlined_call_operand.vmem [shape: f32[2,8,1], index: 5, kind: output, shape index: {}]
  %s6 = sld [smem:[#allocation0]]
  $region61: #{tpu_custom_call.1} parent=0
    _
  %s8 = ssub.s32 1, %s6
  %s9 = scalar_select 0, %s8, %s6
  loop: start=0, step=1, limit=6
  $region2: #{tpu_custom_call.1} parent=0 // loop_pre_header
    _
  $region3: #{tpu_custom_call.1} parent=0 // loop_header
    %s11 = sphi 0, %s15
    %p12 = scmp.ge.s32.totalorder %s11, 6
    %s18 = sphi 0, %s30
    %s19 = sphi 0, %s26
    %s20 = sphi 0, %s18
    %s21 = sphi 0, %s19
    %s22 = sphi 0, %s20
    %s23 = sphi 0, %s21
    %s35 = sphi 0, %s37
    %s38 = sphi 0, %s35
    %s39 = sphi 0, %s38
    %s55 = sphi 0, %s39
    %s59 = sphi 0, %s59
    %s61 = sphi 0, %s59
    %s62 = sphi 0, %s61
    %s76 = sphi 0, %s62
    %s80 = sphi 0, %s80
    %s82 = sphi 0, %s80
    %s83 = sphi 0, %s82
    %s97 = sphi 0, %s83
    %s101 = sphi 0, %s101
    %s103 = sphi 0, %s101
    %s104 = sphi 0, %s103
    %s118 = sphi 0, %s104
    %s122 = sphi 0, %s122
    %s124 = sphi 0, %s122
    %s125 = sphi 0, %s124
    %s139 = sphi 0, %s125
    %s145 = sphi 0, %s147
    %s148 = sphi 0, %s145
    %s149 = sphi 0, %s148
    %s165 = sphi 0, %s149
  $region4: #{tpu_custom_call.1} parent=0 // loop_header_branch
    %14 = sbr.rel (%p12) target = $region8
  $region5: #{tpu_custom_call.1} parent=0 // loop_body
    %s16 = ssub.s32 %s11, 1
    %s17 = ssub.s32 %s11, 2
    %s24 = sadd.s32 1, %s19
    %p25 = scmp.ge.s32.totalorder %s24, 2
    %s26 = scalar_select %p25, 0, %s24
    %s27 = sadd.s32 1, %s18
    %s28 = scalar_select %p25, %s27, %s18
    %p29 = scmp.ge.s32.totalorder %s28, 2
    %s30 = scalar_select %p29, 0, %s28
    %s31 = ssub.s32 %s18, %s30
    %s32 = ssub.s32 %s19, %s26
    %s33 = sor.u32 %s31, %s32
    %p34 = scmp.eq.s32.totalorder %s33, 0
    %s36 = sadd.s32 %s35, 1
    %s37 = scalar_select %p34, %s35, %s36
    %p40 = pneg %p34
    %p41 = scmp.eq.s32.totalorder %s11, 3
    %p42 = por %p40, %p41
    %p43 = scmp.ne.s32.totalorder %s35, %s38
    %p44 = scmp.eq.s32.totalorder %s11, 0
    %p45 = por %p43, %p44
    %p46 = scmp.ne.s32.totalorder %s35, %s38
    %p47 = scmp.eq.s32.totalorder %s16, 3
    %p48 = por %p46, %p47
    %p49 = scmp.ne.s32.totalorder %s38, %s39
    %p50 = scmp.eq.s32.totalorder %s16, 0
    %p51 = por %p49, %p50
    %p52 = scmp.ne.s32.totalorder %s38, %s39
    %p53 = scmp.eq.s32.totalorder %s17, 3
    %p54 = por %p52, %p53
    %p56 = scmp.ne.s32.totalorder %s39, %s55
    %p57 = scmp.eq.s32.totalorder %s17, 0
    %p58 = por %p56, %p57
    %s60 = sadd.s32 %s59, 1
    %p63 = scmp.eq.s32.totalorder %s11, 3
    %p64 = scmp.ne.s32.totalorder %s59, %s61
    %p65 = scmp.eq.s32.totalorder %s11, 0
    %p66 = por %p64, %p65
    %p67 = scmp.ne.s32.totalorder %s59, %s61
    %p68 = scmp.eq.s32.totalorder %s16, 3
    %p69 = por %p67, %p68
    %p70 = scmp.ne.s32.totalorder %s61, %s62
    %p71 = scmp.eq.s32.totalorder %s16, 0
    %p72 = por %p70, %p71
    %p73 = scmp.ne.s32.totalorder %s61, %s62
    %p74 = scmp.eq.s32.totalorder %s17, 3
    %p75 = por %p73, %p74
    %p77 = scmp.ne.s32.totalorder %s62, %s76
    %p78 = scmp.eq.s32.totalorder %s17, 0
    %p79 = por %p77, %p78
    %s81 = sadd.s32 %s80, 1
    %p84 = scmp.eq.s32.totalorder %s11, 3
    %p85 = scmp.ne.s32.totalorder %s80, %s82
    %p86 = scmp.eq.s32.totalorder %s11, 0
    %p87 = por %p85, %p86
    %p88 = scmp.ne.s32.totalorder %s80, %s82
    %p89 = scmp.eq.s32.totalorder %s16, 3
    %p90 = por %p88, %p89
    %p91 = scmp.ne.s32.totalorder %s82, %s83
    %p92 = scmp.eq.s32.totalorder %s16, 0
    %p93 = por %p91, %p92
    %p94 = scmp.ne.s32.totalorder %s82, %s83
    %p95 = scmp.eq.s32.totalorder %s17, 3
    %p96 = por %p94, %p95
    %p98 = scmp.ne.s32.totalorder %s83, %s97
    %p99 = scmp.eq.s32.totalorder %s17, 0
    %p100 = por %p98, %p99
    %s102 = sadd.s32 %s101, 1
    %p105 = scmp.eq.s32.totalorder %s11, 3
    %p106 = scmp.ne.s32.totalorder %s101, %s103
    %p107 = scmp.eq.s32.totalorder %s11, 0
    %p108 = por %p106, %p107
    %p109 = scmp.ne.s32.totalorder %s101, %s103
    %p110 = scmp.eq.s32.totalorder %s16, 3
    %p111 = por %p109, %p110
    %p112 = scmp.ne.s32.totalorder %s103, %s104
    %p113 = scmp.eq.s32.totalorder %s16, 0
    %p114 = por %p112, %p113
    %p115 = scmp.ne.s32.totalorder %s103, %s104
    %p116 = scmp.eq.s32.totalorder %s17, 3
    %p117 = por %p115, %p116
    %p119 = scmp.ne.s32.totalorder %s104, %s118
    %p120 = scmp.eq.s32.totalorder %s17, 0
    %p121 = por %p119, %p120
    %s123 = sadd.s32 %s122, 1
    %p126 = scmp.eq.s32.totalorder %s11, 3
    %p127 = scmp.ne.s32.totalorder %s122, %s124
    %p128 = scmp.eq.s32.totalorder %s11, 0
    %p129 = por %p127, %p128
    %p130 = scmp.ne.s32.totalorder %s122, %s124
    %p131 = scmp.eq.s32.totalorder %s16, 3
    %p132 = por %p130, %p131
    %p133 = scmp.ne.s32.totalorder %s124, %s125
    %p134 = scmp.eq.s32.totalorder %s16, 0
    %p135 = por %p133, %p134
    %p136 = scmp.ne.s32.totalorder %s124, %s125
    %p137 = scmp.eq.s32.totalorder %s17, 3
    %p138 = por %p136, %p137
    %p140 = scmp.ne.s32.totalorder %s125, %s139
    %p141 = scmp.eq.s32.totalorder %s17, 0
    %p142 = por %p140, %p141
    %s143 = ssub.s32 %s18, %s30
    %p144 = scmp.eq.s32.totalorder %s143, 0
    %s146 = sadd.s32 %s145, 1
    %s147 = scalar_select %p144, %s145, %s146
    %p150 = pneg %p144
    %p151 = scmp.eq.s32.totalorder %s11, 3
    %p152 = por %p150, %p151
    %p153 = scmp.ne.s32.totalorder %s145, %s148
    %p154 = scmp.eq.s32.totalorder %s11, 0
    %p155 = por %p153, %p154
    %p156 = scmp.ne.s32.totalorder %s145, %s148
    %p157 = scmp.eq.s32.totalorder %s16, 3
    %p158 = por %p156, %p157
    %p159 = scmp.ne.s32.totalorder %s148, %s149
    %p160 = scmp.eq.s32.totalorder %s16, 0
    %p161 = por %p159, %p160
    %p162 = scmp.ne.s32.totalorder %s148, %s149
    %p163 = scmp.eq.s32.totalorder %s17, 3
    %p164 = por %p162, %p163
    %p166 = scmp.ne.s32.totalorder %s149, %s165
    %p167 = scmp.eq.s32.totalorder %s17, 0
    %p168 = por %p166, %p167
    %p169 = scmp.le.s32.totalorder 1, %s11
    %p170 = scmp.lt.s32.totalorder %s11, 5
    %p171 = pnand %p169, %p170
    %p172 = pneg %p171
    // Predicated region
    $region9: #{tpu_custom_call.1} parent=5 // pred_check
      _
    $region10: #{tpu_custom_call.1} parent=5 // pred_check_branch
      %174 = sbr.rel (%p171) target = $region12
    $region11: #{tpu_custom_call.1} parent=5 // pred_region
      %s175 = ssub.s32 %s11, 1
      // Predicated region
      $region13: #{tpu_custom_call.1} parent=11 // pred_check
        %p176 = pneg %p72
      $region14: #{tpu_custom_call.1} parent=11 // pred_check_branch
        %178 = sbr.rel (%p176) target = $region16
      $region15: #{tpu_custom_call.1} parent=11 // pred_region
        _
      $region16: #{tpu_custom_call.1} parent=11 // pred_fallthru
        _
      // Predicated region
      $region17: #{tpu_custom_call.1} parent=11 // pred_check
        %p179 = pneg %p93
      $region18: #{tpu_custom_call.1} parent=11 // pred_check_branch
        %181 = sbr.rel (%p179) target = $region20
      $region19: #{tpu_custom_call.1} parent=11 // pred_region
        _
      $region20: #{tpu_custom_call.1} parent=11 // pred_fallthru
        _
      // Predicated region
      $region21: #{tpu_custom_call.1} parent=11 // pred_check
        %p182 = pneg %p114
      $region22: #{tpu_custom_call.1} parent=11 // pred_check_branch
        %184 = sbr.rel (%p182) target = $region24
      $region23: #{tpu_custom_call.1} parent=11 // pred_region
        _
      $region24: #{tpu_custom_call.1} parent=11 // pred_fallthru
        _
      // Predicated region
      $region25: #{tpu_custom_call.1} parent=11 // pred_check
        %p185 = pneg %p135
      $region26: #{tpu_custom_call.1} parent=11 // pred_check_branch
        %187 = sbr.rel (%p185) target = $region28
      $region27: #{tpu_custom_call.1} parent=11 // pred_region
        _
      $region28: #{tpu_custom_call.1} parent=11 // pred_fallthru
        _
    $region12: #{tpu_custom_call.1} parent=5 // pred_fallthru
      _
    %p188 = scmp.lt.s32.totalorder %s11, 4
    // Predicated region
    $region29: #{tpu_custom_call.1} parent=5 // pred_check
      %p189 = pneg %p188
    $region30: #{tpu_custom_call.1} parent=5 // pred_check_branch
      %191 = sbr.rel (%p189) target = $region32
    $region31: #{tpu_custom_call.1} parent=5 // pred_region
      // Predicated region
      $region33: #{tpu_custom_call.1} parent=31 // pred_check
        %p192 = pneg %p45
      $region34: #{tpu_custom_call.1} parent=31 // pred_check_branch
        %194 = sbr.rel (%p192) target = $region36
      $region35: #{tpu_custom_call.1} parent=31 // pred_region
        %p195 = scmp.lt.s32.totalorder %s18, 1
        %s196 = scalar_select %p195, %s18, 1
        %p197 = scmp.lt.s32.totalorder %s19, 1
        %s198 = scalar_select %p197, %s19, 1
        %s199 = smul.addr %s196, 2
        %s200 = sadd.s32 %s198, %s199
        %s201 = smul.addr %s200, 4
        %s202 = scalar_lea.vmem %s0, %s201
      $region36: #{tpu_custom_call.1} parent=31 // pred_fallthru
        _
    $region32: #{tpu_custom_call.1} parent=5 // pred_fallthru
      _
    %p203 = scmp.le.s32.totalorder 1, %s11
    %p204 = scmp.lt.s32.totalorder %s11, 5
    %p205 = pnand %p203, %p204
    %p206 = pneg %p205
    // Predicated region
    $region37: #{tpu_custom_call.1} parent=5 // pred_check
      _
    $region38: #{tpu_custom_call.1} parent=5 // pred_check_branch
      %208 = sbr.rel (%p205) target = $region40
    $region39: #{tpu_custom_call.1} parent=5 // pred_region
      %s209 = ssub.s32 %s11, 1
      %p210 = scmp.lt.s32.totalorder %s20, 1
      %s211 = scalar_select %p210, %s20, 1
      %p212 = scmp.lt.s32.totalorder %s21, 1
      %s213 = scalar_select %p212, %s21, 1
      %s214 = smul.addr %s211, 2
      %s215 = sadd.s32 %s213, %s214
      %s216 = smul.addr %s215, 4
      %s217 = scalar_lea.vmem %s0, %s216
      %p218 = pneg %p51
      %p219 = pneg %p48
      %p220 = pneg %p72
      %p221 = pneg %p69
      %p222 = pneg %p93
      %p223 = pneg %p90
      %p224 = pneg %p114
      %p225 = pneg %p111
      %p226 = pneg %p135
      %p227 = pneg %p132
      %p228 = pneg %p161
      %p229 = pneg %p158
      %p230 = scmp.lt.s32.totalorder %s20, 1
      %s231 = scalar_select %p230, %s20, 1
      %s232 = smul.addr %s231, 8
      %s233 = scalar_lea.vmem %s5, %s232
      %p234 = scmp.lt.s32.totalorder %s20, 1
      %s235 = scalar_select %p234, %s20, 1
      %p236 = scmp.lt.s32.totalorder %s21, 1
      %s237 = scalar_select %p236, %s21, 1
      %s238 = smul.addr %s235, 2
      %s239 = sadd.s32 %s237, %s238
      %s240 = smul.addr %s239, 4
      %s241 = scalar_lea.vmem %s0, %s240
      %p242 = scmp.lt.s32.totalorder %s20, 1
      %s243 = scalar_select %p242, %s20, 1
      %s244 = smul.addr %s243, 8
      %s245 = scalar_lea.vmem %s5, %s244
      %p246 = scmp.eq.s32.totalorder %s21, 0
      // Predicated region
      $region41: #{tpu_custom_call.1} parent=39 // pred_check
        %p247 = pneg %p246
      $region42: #{tpu_custom_call.1} parent=39 // pred_check_branch
        %249 = sbr.rel (%p247) target = $region44
      $region43: #{tpu_custom_call.1} parent=39 // pred_region
        %vm250 = vcmask 7168
        %251 = vst.msk [vmem:[#allocation2] sm:$0xff] %vm250, 0.0
        %252 = vst.msk [vmem:[#allocation2 + $0x8] sm:$0xff] %vm250, 0.0
        %253 = vst.msk [vmem:[#allocation2 + $0x10] sm:$0xff] %vm250, 0.0
        %254 = vst.msk [vmem:[#allocation2 + $0x18] sm:$0xff] %vm250, 0.0
      $region44: #{tpu_custom_call.1} parent=39 // pred_fallthru
        _
      %v255 = vld [vmem:[%s1] sm:$0xff]
      %v256 = vld [vmem:[%s1 + $0x8] sm:$0xff]
      %v257 = vld [vmem:[%s1 + $0x10] sm:$0xff]
      %v258 = vld [vmem:[%s1 + $0x18] sm:$0xff]
      %v259 = vld [vmem:[%s241] sm:$0xf]
      %v260 = vld [vmem:[%s2] sm:$0xff]
      %v261 = vld [vmem:[%s2 + $0x8] sm:$0xff]
      %v262 = vld [vmem:[%s2 + $0x10] sm:$0xff]
      %v263 = vld [vmem:[%s2 + $0x18] sm:$0xff]
      %265 = vset.pattern.permute.xlu0 0
      %266 = vperm.xlu0 %265, %v260
      %v267 = vpop.permute.xlu0 %266
      %270 = vset.pattern.permute.xlu0 0
      %271 = vperm.xlu0 %270, %v261
      %v272 = vpop.permute.xlu0 %271
      %275 = vset.pattern.permute.xlu0 0
      %276 = vperm.xlu0 %275, %v262
      %v277 = vpop.permute.xlu0 %276
      %280 = vset.pattern.permute.xlu0 0
      %281 = vperm.xlu0 %280, %v263
      %v282 = vpop.permute.xlu0 %281
      %vm284 = vcmask 31744
      %v286 = vsel %vm284, %v255, 0
      %v289 = vsel %vm284, %v256, 0
      %v292 = vsel %vm284, %v257, 0
      %v295 = vsel %vm284, %v258, 0
      %vm297 = vcmask 1043456
      %v299 = vsel %vm297, %v259, 0
      %301 = vmatprep.subr.mxu0 0.0
      %302 = vmatpush1.msra.mxu0 %v299
      %303 = vmatprep.subr.mxu0 0.0
      %304 = vmatpush1.msra.mxu0 0.0
      %305 = vmatprep.subr.mxu0 0.0
      %306 = vmatpush1.msra.mxu0 0.0
      %307 = vmatprep.subr.mxu0 0.0
      %308 = vmatpush1.msra.mxu0 0.0
      %309 = vmatprep.subr.mxu0 0.0
      %310 = vmatpush1.msra.mxu0 0.0
      %311 = vmatprep.subr.mxu0 0.0
      %312 = vmatpush1.msra.mxu0 0.0
      %313 = vmatprep.subr.mxu0 0.0
      %314 = vmatpush1.msra.mxu0 0.0
      %315 = vmatprep.subr.mxu0 0.0
      %316 = vmatpush1.msra.mxu0 0.0
      %317 = vmatprep.subr.mxu0 0.0
      %318 = vmatpush1.msra.mxu0 0.0
      %319 = vmatprep.subr.mxu0 0.0
      %320 = vmatpush1.msra.mxu0 0.0
      %321 = vmatprep.subr.mxu0 0.0
      %322 = vmatpush1.msra.mxu0 0.0
      %323 = vmatprep.subr.mxu0 0.0
      %324 = vmatpush1.msra.mxu0 0.0
      %325 = vmatprep.subr.mxu0 0.0
      %326 = vmatpush1.msra.mxu0 0.0
      %327 = vmatprep.subr.mxu0 0.0
      %328 = vmatpush1.msra.mxu0 0.0
      %329 = vmatprep.subr.mxu0 0.0
      %330 = vmatpush1.msra.mxu0 0.0
      %331 = vmatprep.subr.mxu0 0.0
      %332 = vmatpush1.msra.mxu0 0.0
      %333 = vmatprep.subr.mxu0 0.0
      %334 = vmatpush1.msra.mxu0 0.0
      %335 = vmatprep.subr.mxu0 0.0
      %336 = vmatpush1.msra.mxu0 0.0
      %337 = vmatprep.subr.mxu0 0.0
      %338 = vmatpush1.msra.mxu0 0.0
      %339 = vmatprep.subr.mxu0 0.0
      %340 = vmatpush1.msra.mxu0 0.0
      %341 = vmatprep.subr.mxu0 0.0
      %342 = vmatpush1.msra.mxu0 0.0
      %343 = vmatprep.subr.mxu0 0.0
      %344 = vmatpush1.msra.mxu0 0.0
      %345 = vmatprep.subr.mxu0 0.0
      %346 = vmatpush1.msra.mxu0 0.0
      %347 = vmatprep.subr.mxu0 0.0
      %348 = vmatpush1.msra.mxu0 0.0
      %349 = vmatprep.subr.mxu0 0.0
      %350 = vmatpush1.msra.mxu0 0.0
      %351 = vmatprep.subr.mxu0 0.0
      %352 = vmatpush1.msra.mxu0 0.0
      %353 = vmatprep.subr.mxu0 0.0
      %354 = vmatpush1.msra.mxu0 0.0
      %355 = vmatprep.subr.mxu0 0.0
      %356 = vmatpush1.msra.mxu0 0.0
      %357 = vmatprep.subr.mxu0 0.0
      %358 = vmatpush1.msra.mxu0 0.0
      %359 = vmatprep.subr.mxu0 0.0
      %360 = vmatpush1.msra.mxu0 0.0
      %361 = vmatprep.subr.mxu0 0.0
      %362 = vmatpush1.msra.mxu0 0.0
      %363 = vmatprep.subr.mxu0 0.0
      %364 = vmatpush1.msra.mxu0 0.0
      %365 = vmatprep.mubr.f32.mxu0 0.0
      %366 = vmatmul.mubr.f32.gmra.mrb[0].mxu0 %v286
      %v367 = vpop.f32.mrb[0].mxu0
      %v368 = vadd.f32 %v267, %v367
      %v369 = vpop.f32.mrb[0].mxu0
      %370 = vmatprep.mubr.f32.mxu0 0.0
      %371 = vmatmul.mubr.f32.gmra.mrb[0].mxu0 %v289
      %v372 = vpop.f32.mrb[0].mxu0
      %v373 = vadd.f32 %v272, %v372
      %v374 = vpop.f32.mrb[0].mxu0
      %375 = vmatprep.mubr.f32.mxu0 0.0
      %376 = vmatmul.mubr.f32.gmra.mrb[0].mxu0 %v292
      %v377 = vpop.f32.mrb[0].mxu0
      %v378 = vadd.f32 %v277, %v377
      %v379 = vpop.f32.mrb[0].mxu0
      %380 = vmatprep.mubr.f32.mxu0 0.0
      %381 = vmatmul.mubr.f32.gmra.mrb[0].mxu0 %v295
      %v382 = vpop.f32.mrb[0].mxu0
      %v383 = vadd.f32 %v282, %v382
      %v384 = vpop.f32.mrb[0].mxu0
      %385 = vdwg.mxu0
      %v386 = vmax.f32 %v368, 0.0
      %v387 = vmax.f32 %v373, 0.0
      %v388 = vmax.f32 %v378, 0.0
      %v389 = vmax.f32 %v383, 0.0
      %v390 = vld [vmem:[#allocation2] sm:$0xff]
      %v391 = vld [vmem:[#allocation2 + $0x8] sm:$0xff]
      %v392 = vld [vmem:[#allocation2 + $0x10] sm:$0xff]
      %v393 = vld [vmem:[#allocation2 + $0x18] sm:$0xff]
      %394 = vadd.xlane.f32.xlu0 %v386
      %v395 = vpop.xlane.xlu0 %394
      %396 = vadd.xlane.f32.xlu0 %v387
      %v397 = vpop.xlane.xlu0 %396
      %398 = vadd.xlane.f32.xlu0 %v388
      %v399 = vpop.xlane.xlu0 %398
      %400 = vadd.xlane.f32.xlu0 %v389
      %v401 = vpop.xlane.xlu0 %400
      %v402 = vadd.f32 %v390, %v395
      %v403 = vadd.f32 %v391, %v397
      %v404 = vadd.f32 %v392, %v399
      %v405 = vadd.f32 %v393, %v401
      %vm406 = vcmask 7168
      %407 = vst.msk [vmem:[#allocation2] sm:$0xff] %vm406, %v402
      %408 = vst.msk [vmem:[#allocation2 + $0x8] sm:$0xff] %vm406, %v403
      %409 = vst.msk [vmem:[#allocation2 + $0x10] sm:$0xff] %vm406, %v404
      %410 = vst.msk [vmem:[#allocation2 + $0x18] sm:$0xff] %vm406, %v405
      %p411 = scmp.eq.s32.totalorder %s21, 1
      // Predicated region
      $region45: #{tpu_custom_call.1} parent=39 // pred_check
        %p412 = pneg %p411
      $region46: #{tpu_custom_call.1} parent=39 // pred_check_branch
        %414 = sbr.rel (%p412) target = $region48
      $region47: #{tpu_custom_call.1} parent=39 // pred_region
        %v415 = vld [vmem:[#allocation2] sm:$0xff]
        %v416 = vld [vmem:[#allocation2 + $0x8] sm:$0xff]
        %v417 = vld [vmem:[#allocation2 + $0x10] sm:$0xff]
        %v418 = vld [vmem:[#allocation2 + $0x18] sm:$0xff]
        %v419 = vmul.f32 %v415, 0.00390625
        %v420 = vmul.f32 %v416, 0.00390625
        %v421 = vmul.f32 %v417, 0.00390625
        %v422 = vmul.f32 %v418, 0.00390625
        %v423 = vld [vmem:[%s3] sm:$0xff]
        %v424 = vld [vmem:[%s4] sm:$0xff]
        %vm425 = vcmask 261120
        %v427 = vsel %vm425, %v423, 0
        %429 = vmatprep.subr.mxu0 0.0
        %430 = vmatpush1.msra.mxu0 %v419
        %431 = vmatprep.subr.mxu0 0.0
        %432 = vmatpush1.msra.mxu0 %v420
        %433 = vmatprep.subr.mxu0 0.0
        %434 = vmatpush1.msra.mxu0 %v421
        %435 = vmatprep.subr.mxu0 0.0
        %436 = vmatpush1.msra.mxu0 %v422
        %437 = vmatprep.subr.mxu0 0.0
        %438 = vmatpush1.msra.mxu0 0.0
        %439 = vmatprep.subr.mxu0 0.0
        %440 = vmatpush1.msra.mxu0 0.0
        %441 = vmatprep.subr.mxu0 0.0
        %442 = vmatpush1.msra.mxu0 0.0
        %443 = vmatprep.subr.mxu0 0.0
        %444 = vmatpush1.msra.mxu0 0.0
        %445 = vmatprep.subr.mxu0 0.0
        %446 = vmatpush1.msra.mxu0 0.0
        %447 = vmatprep.subr.mxu0 0.0
        %448 = vmatpush1.msra.mxu0 0.0
        %449 = vmatprep.subr.mxu0 0.0
        %450 = vmatpush1.msra.mxu0 0.0
        %451 = vmatprep.subr.mxu0 0.0
        %452 = vmatpush1.msra.mxu0 0.0
        %453 = vmatprep.subr.mxu0 0.0
        %454 = vmatpush1.msra.mxu0 0.0
        %455 = vmatprep.subr.mxu0 0.0
        %456 = vmatpush1.msra.mxu0 0.0
        %457 = vmatprep.subr.mxu0 0.0
        %458 = vmatpush1.msra.mxu0 0.0
        %459 = vmatprep.subr.mxu0 0.0
        %460 = vmatpush1.msra.mxu0 0.0
        %461 = vmatprep.subr.mxu0 0.0
        %462 = vmatpush1.msra.mxu0 0.0
        %463 = vmatprep.subr.mxu0 0.0
        %464 = vmatpush1.msra.mxu0 0.0
        %465 = vmatprep.subr.mxu0 0.0
        %466 = vmatpush1.msra.mxu0 0.0
        %467 = vmatprep.subr.mxu0 0.0
        %468 = vmatpush1.msra.mxu0 0.0
        %469 = vmatprep.subr.mxu0 0.0
        %470 = vmatpush1.msra.mxu0 0.0
        %471 = vmatprep.subr.mxu0 0.0
        %472 = vmatpush1.msra.mxu0 0.0
        %473 = vmatprep.subr.mxu0 0.0
        %474 = vmatpush1.msra.mxu0 0.0
        %475 = vmatprep.subr.mxu0 0.0
        %476 = vmatpush1.msra.mxu0 0.0
        %477 = vmatprep.subr.mxu0 0.0
        %478 = vmatpush1.msra.mxu0 0.0
        %479 = vmatprep.subr.mxu0 0.0
        %480 = vmatpush1.msra.mxu0 0.0
        %481 = vmatprep.subr.mxu0 0.0
        %482 = vmatpush1.msra.mxu0 0.0
        %483 = vmatprep.subr.mxu0 0.0
        %484 = vmatpush1.msra.mxu0 0.0
        %485 = vmatprep.subr.mxu0 0.0
        %486 = vmatpush1.msra.mxu0 0.0
        %487 = vmatprep.subr.mxu0 0.0
        %488 = vmatpush1.msra.mxu0 0.0
        %489 = vmatprep.subr.mxu0 0.0
        %490 = vmatpush1.msra.mxu0 0.0
        %491 = vmatprep.subr.mxu0 0.0
        %492 = vmatpush1.msra.mxu0 0.0
        %493 = vmatprep.mubr.f32.mxu0 0.0
        %494 = vmatmul.mubr.f32.gmra.mrb[0].mxu0 %v427
        %v495 = vpop.f32.mrb[0].mxu0
        %v496 = vadd.f32 %v424, %v495
        %v497 = vpop.f32.mrb[0].mxu0
        %498 = vdwg.mxu0
        %499 = vst.msk [vmem:[%s245] sm:$0xff] %vm406, %v496
      $region48: #{tpu_custom_call.1} parent=39 // pred_fallthru
        _
      %p500 = scmp.lt.s32.totalorder %s20, 1
      %s501 = scalar_select %p500, %s20, 1
      %s502 = smul.addr %s501, 8
      %s503 = scalar_lea.vmem %s5, %s502
      // Predicated region
      $region49: #{tpu_custom_call.1} parent=39 // pred_check
        %p504 = pneg %p158
      $region50: #{tpu_custom_call.1} parent=39 // pred_check_branch
        %506 = sbr.rel (%p504) target = $region52
      $region51: #{tpu_custom_call.1} parent=39 // pred_region
        _
      $region52: #{tpu_custom_call.1} parent=39 // pred_fallthru
        _
    $region40: #{tpu_custom_call.1} parent=5 // pred_fallthru
      _
    %p507 = scmp.le.s32.totalorder 2, %s11
    // Predicated region
    $region53: #{tpu_custom_call.1} parent=5 // pred_check
      %p508 = pneg %p507
    $region54: #{tpu_custom_call.1} parent=5 // pred_check_branch
      %510 = sbr.rel (%p508) target = $region56
    $region55: #{tpu_custom_call.1} parent=5 // pred_region
      %s511 = ssub.s32 %s11, 2
      // Predicated region
      $region57: #{tpu_custom_call.1} parent=55 // pred_check
        %p512 = pneg %p164
      $region58: #{tpu_custom_call.1} parent=55 // pred_check_branch
        %514 = sbr.rel (%p512) target = $region60
      $region59: #{tpu_custom_call.1} parent=55 // pred_region
        %p515 = scmp.lt.s32.totalorder %s22, 1
        %s516 = scalar_select %p515, %s22, 1
        %s517 = smul.addr %s516, 8
        %s518 = scalar_lea.vmem %s5, %s517
      $region60: #{tpu_custom_call.1} parent=55 // pred_fallthru
        _
    $region56: #{tpu_custom_call.1} parent=5 // pred_fallthru
      _
  $region6: #{tpu_custom_call.1} parent=0 // loop_footer
    %s15 = sadd.s32 1, %s11
  $region7: #{tpu_custom_call.1} parent=0 // loop_footer_branch
    %10 = sbr.rel target = $region3
  $region8: #{tpu_custom_call.1} parent=0 // loop_exit
    _

</llo_original>
